<compile_context>
chip_gen: v7x
topology: tpu7x:2x2x1
jax: 0.10.0
libtpu: 0.0.40
codegen_flags: <defaults>
</compile_context>

<pallas_src>
import math

import jax
import jax.numpy as jnp
from jax.experimental import pallas as pl
from jax.experimental.pallas import tpu as pltpu


# -----------------------------------------------------------------------------
# Kernels
# -----------------------------------------------------------------------------
def _alias_noop_kernel(x_ref, o_ref, flag_ref):
    # The output buffer aliases the input buffer (input_output_aliases={0: 0});
    # the flatten was already performed by the wrapper's metadata-only reshape,
    # so there is nothing to compute and nothing to move.  Touch an SMEM
    # scratch so the kernel body is non-trivial for the compiler.
    del x_ref, o_ref
    flag_ref[0] = jnp.int32(0)


def _dma_copy_kernel(x_ref, o_ref, sem):
    # Fallback: a single HBM->HBM DMA of the whole (already flattened) array.
    # The DMA engine streams the contiguous buffer directly — no VMEM staging,
    # no per-tile pipeline overhead, no lane/sublane layout constraints.
    copy = pltpu.make_async_copy(x_ref, o_ref, sem)
    copy.start()
    copy.wait()


# -----------------------------------------------------------------------------
# pallas_call wrappers
# -----------------------------------------------------------------------------
def _alias_call(x2: jax.Array) -> jax.Array:
    """Zero-HBM-traffic path: output aliases the (already flattened) input."""
    return pl.pallas_call(
        _alias_noop_kernel,
        out_shape=jax.ShapeDtypeStruct(x2.shape, x2.dtype),
        in_specs=[pl.BlockSpec(memory_space=pl.ANY)],
        out_specs=pl.BlockSpec(memory_space=pl.ANY),
        scratch_shapes=[pltpu.SMEM((1,), jnp.int32)],
        input_output_aliases={0: 0},
    )(x2)


def _dma_call(x2: jax.Array) -> jax.Array:
    """Fallback path: one HBM->HBM DMA copy (no VMEM residency at all)."""
    nbytes = x2.size * jnp.dtype(x2.dtype).itemsize
    return pl.pallas_call(
        _dma_copy_kernel,
        out_shape=jax.ShapeDtypeStruct(x2.shape, x2.dtype),
        in_specs=[pl.BlockSpec(memory_space=pl.ANY)],
        out_specs=pl.BlockSpec(memory_space=pl.ANY),
        scratch_shapes=[pltpu.SemaphoreType.DMA],
        cost_estimate=pl.CostEstimate(
            flops=0, transcendentals=0, bytes_accessed=2 * nbytes
        ),
    )(x2)


def flatten_pallas(x: jax.Array) -> jax.Array:
    """Equivalent of torch.flatten(x, start_dim=1) / nn.Flatten()."""
    if x.ndim < 2:
        # torch.flatten(x, start_dim=1) raises "dimension out of range" for
        # 0-D / 1-D tensors; mirror that behavior explicitly.
        raise ValueError(
            f"Flatten(start_dim=1) requires x.ndim >= 2, got shape {x.shape}"
        )

    B = x.shape[0]
    F = math.prod(x.shape[1:])

    # Free, metadata-only reshape (row-major / C-order — identical element
    # ordering to torch.flatten(start_dim=1) on a contiguous tensor).
    x2 = x.reshape(B, F)

    if x2.size == 0:
        return x2  # nothing to move for zero-sized arrays

    try:
        # Best case: the pallas_call is metadata-only (buffer aliasing).
        return _alias_call(x2)
    except Exception:
        # Conservative fallback: single HBM->HBM DMA copy.  Still avoids the
        # tiled VMEM copy and every per-generation VMEM-budget concern.
        return _dma_call(x2)


if __name__ == "__main__":
    key = jax.random.PRNGKey(0)
    key_a, key_b = jax.random.split(key)

    # Small NCHW activation consistent with the module.
    B, C, H, W = 2, 4, 16, 16
    x = jax.random.normal(key_a, (B, C, H, W), dtype=jnp.float32)

    y = flatten_pallas(x)
    jax.block_until_ready(y)

    # Reference: plain JAX reshape (same semantics as torch.flatten(start_dim=1)).
    y_ref = x.reshape(B, C * H * W)
    assert y.shape == (B, C * H * W), y.shape
    assert y.dtype == x.dtype
    assert jnp.array_equal(y, y_ref), "Flatten kernel mismatch vs reference"

    # Also exercise a flattened feature dim that is NOT a multiple of 128
    # (F = 3*7*7 = 147); this path has no lane-density constraints.
    x_odd = jax.random.normal(key_b, (2, 3, 7, 7), dtype=jnp.float32)
    y_odd = flatten_pallas(x_odd)
    jax.block_until_ready(y_odd)
    assert jnp.array_equal(y_odd, x_odd.reshape(2, 3 * 7 * 7)), "odd-F mismatch"

    print("KERNEL_OK")
</pallas_src>

<mosaic_0001>
module attributes {stable_mosaic.version = 11 : i64} {
  func.func @_alias_noop_kernel(%arg0: memref<2x1024xf32, #tpu.memory_space<any>>, %arg1: memref<2x1024xf32, #tpu.memory_space<any>>, %arg2: memref<1xi32, #tpu.memory_space<smem>>) attributes {dimension_semantics = [], scalar_prefetch = 0 : i64, scratch_operands = 1 : i64, tpu.core_type = #tpu.core_type<tc>} {
    %c0_i32 = arith.constant 0 : i32
    %c0 = arith.constant 0 : index
    %0 = memref.load %arg2[%c0] : memref<1xi32, #tpu.memory_space<smem>>
    memref.store %c0_i32, %arg2[%c0] : memref<1xi32, #tpu.memory_space<smem>>
    return
  }
}

module attributes {stable_mosaic.version = 11 : i64} {
  func.func @_dma_copy_kernel(%arg0: memref<2x1024xf32, #tpu.memory_space<any>>, %arg1: memref<2x1024xf32, #tpu.memory_space<any>>, %arg2: memref<!tpu.dma_semaphore, #tpu.memory_space<semaphore_mem>>) attributes {dimension_semantics = [], scalar_prefetch = 0 : i64, scratch_operands = 1 : i64, tpu.core_type = #tpu.core_type<tc>} {
    tpu.enqueue_dma source(%arg0 : memref<2x1024xf32, #tpu.memory_space<any>>) target(%arg1 : memref<2x1024xf32, #tpu.memory_space<any>>) target_semaphore(%arg2 : memref<!tpu.dma_semaphore, #tpu.memory_space<semaphore_mem>>)
    tpu.wait_dma2 semaphore(%arg2 : memref<!tpu.dma_semaphore, #tpu.memory_space<semaphore_mem>>) src(%arg0 : memref<2x1024xf32, #tpu.memory_space<any>>) dst(%arg1 : memref<2x1024xf32, #tpu.memory_space<any>>)
    return
  }
}

</mosaic_0001>

<llo_original>
// kernel: tpu_custom_call.1
$region0: #{tpu_custom_call.1}
  #allocation0 [shape = 'u32[]', space=smem, size = 0x4, offset = 0x4, fixed_abs, tag = 'smem constant byte address 0x4 - core index']
  #allocation1 [shape = 'u32[144,128]{1,0:T(1,128)}', space=vmem, size = 0x12000, scoped, tag = 'internal scratch']
  #allocation2 [shape = 's32[1]{0:T(128)}', space=smem, size = 0x200, scoped, tag = 'scratch operand']
  %s0 = inlined_call_operand.hbm [shape: f32[2,1024], index: 0, kind: input, shape index: {}, may-alias: {0,1}]
  %s1 = inlined_call_operand.hbm [shape: f32[2,1024], index: 1, kind: output, shape index: {}, may-alias: {0,1}]
  %s2 = sld [smem:[#allocation0]]
  $region2: #{tpu_custom_call.1} parent=0
    _
  %s4 = ssub.s32 1, %s2
  %s5 = scalar_select 0, %s4, %s2
  %s6 = scalar_lea.smem [#allocation2], 0
  %7 = sst [smem:[%s6]] 0

// kernel: tpu_custom_call.1
$region0: #{tpu_custom_call.1}
  #allocation0 [shape = 'u32[]', space=smem, size = 0x4, offset = 0x4, fixed_abs, tag = 'smem constant byte address 0x4 - core index']
  #allocation1 [shape = 'u32[144,128]{1,0:T(1,128)}', space=vmem, size = 0x12000, scoped, tag = 'internal scratch']
  #allocation2 [shape = 's32[1]{0}', space=sflag, size = 0x4, scoped, tag = 'scratch operand']
  #allocation3 [shape = 's32[]', space=sflag, size = 0x4, offset = 0, fixed_abs, tag = 'sflag constant byte address 0x0 - dummy sync flag']
  #allocation4 [shape = 'u32[0]{0}', space=smem, size = 0, offset = 0, fixed_abs, tag = 'smem constant byte address 0x0 - null']
  %s0 = inlined_call_operand.hbm [shape: f32[2,1024], index: 0, kind: input, shape index: {}]
  %s1 = inlined_call_operand.hbm [shape: f32[2,1024], index: 1, kind: output, shape index: {}]
  %s2 = sld [smem:[#allocation0]]
  $region2: #{tpu_custom_call.1} parent=0
    _
  %s4 = ssub.s32 1, %s2
  %s5 = scalar_select 0, %s4, %s2
  %s7 = sshll.u32 1, 14
  %s8 = sxor.u32 4294967295, %s7
  %s11 = sshll.u32 3, 24
  %s12 = sxor.u32 4294967295, %s11
  %s13 = sand.u32 0, %s12
  %s15 = sor.u32 %s13, 0
  %18 = dma.general %s0, 256, %s1, [#allocation2], [#allocation3], [#allocation4], %s15, 0
  %s19 = smul.u32 2, 1
  %s20 = smul.u32 %s19, 8
  %s21 = sshll.u32 %s20, 4
  %22 = dma.done [#allocation2], %s21
  %23 = vsyncmov [#allocation2]
  %s24 = vpop.sfrf %23
  %p25 = scmp.eq.s32.totalorder %s24, 0
  %p26 = pneg %p25
  %28 = shalt.err (%p26)

</llo_original>
